<compile_context>
chip_gen: v6e
topology: v6e:2x2x1
jax: 0.10.0
libtpu: 0.0.40
codegen_flags: <defaults>
</compile_context>

<pallas_src>
import jax
import jax.numpy as jnp
from jax.experimental import pallas as pl
from jax.experimental.pallas import tpu as pltpu


def _round_up(x: int, m: int) -> int:
    return ((x + m - 1) // m) * m


def _pick_tile(padded: int, unit: int, cap: int) -> int:
    """Pick a tile size (multiple of `unit`, <= cap, <= padded) minimizing the
    total padded extent round_up(padded, tile); ties go to the larger tile."""
    hi = min(cap, padded)
    hi -= hi % unit
    hi = max(hi, unit)
    best_t, best_total = unit, _round_up(padded, unit)
    for t in range(unit, hi + 1, unit):
        total = _round_up(padded, t)
        if total < best_total or (total == best_total and t > best_t):
            best_t, best_total = t, total
    return best_t


# ----------------------------- kernels --------------------------------------


def _linear_kernel_single(x_ref, w_ref, b_ref, o_ref):
    # Whole problem resident in VMEM: one MXU matmul + bias, no grid machinery.
    o_ref[...] = (
        jnp.dot(x_ref[...], w_ref[...], preferred_element_type=jnp.float32)
        + b_ref[...]
    ).astype(o_ref.dtype)


def _linear_kernel_tiled_f32(x_ref, w_ref, b_ref, o_ref):
    # f32 output: accumulate directly into the resident output block (its
    # block index is K-invariant), so no scratch accumulator is needed.
    k = pl.program_id(2)

    @pl.when(k == 0)
    def _():
        o_ref[...] = jnp.zeros_like(o_ref)

    o_ref[...] += jnp.dot(
        x_ref[...], w_ref[...], preferred_element_type=jnp.float32
    )

    @pl.when(k == pl.num_programs(2) - 1)
    def _():
        o_ref[...] += b_ref[...].astype(o_ref.dtype)


def _linear_kernel_tiled_acc(x_ref, w_ref, b_ref, o_ref, acc_ref):
    # Fallback for non-f32 output dtypes: f32 scratch accumulator + finalize.
    k = pl.program_id(2)

    @pl.when(k == 0)
    def _():
        acc_ref[...] = jnp.zeros_like(acc_ref)

    acc_ref[...] += jnp.dot(
        x_ref[...], w_ref[...], preferred_element_type=jnp.float32
    )

    @pl.when(k == pl.num_programs(2) - 1)
    def _():
        o_ref[...] = (acc_ref[...] + b_ref[...]).astype(o_ref.dtype)


# ----------------------------- wrapper ---------------------------------------


def make_fully_connected(w, b, *, cap_m=256, cap_n=512, cap_k=1024,
                         fast_path_bytes=4 << 20):
    """Build the forward fn. w: [input_dim, output_dim] (transposed PyTorch
    weight), b: [output_dim]. Parameters are padded once, here."""
    in_dim, out_dim = w.shape
    assert b.shape == (out_dim,)
    itemsize = jnp.dtype(w.dtype).itemsize

    # Align K/N to (8,128) first, then choose tiles that minimize padded work.
    kp0 = _round_up(in_dim, 128)
    np0 = _round_up(out_dim, 128)
    tk = _pick_tile(kp0, 128, cap_k)
    tn = _pick_tile(np0, 128, cap_n)
    kp = _round_up(kp0, tk)
    np_ = _round_up(np0, tn)

    # Pad parameters ONCE (hoisted out of the per-call hot path). Zero padding
    # keeps the matmul + bias exact: padded K rows / N columns contribute 0.
    wp = jnp.pad(w, ((0, kp - in_dim), (0, np_ - out_dim)))
    bp = jnp.pad(b, (0, np_ - out_dim)).reshape(1, np_)

    @jax.jit
    def forward(x):
        n, k_in = x.shape
        assert k_in == in_dim
        dtype = x.dtype
        mp0 = _round_up(max(n, 1), 8)

        # ---------------- single-block fast path ----------------
        total_bytes = (mp0 * kp + kp * np_ + np_ + mp0 * np_) * itemsize
        if total_bytes <= fast_path_bytes:
            xp = jnp.pad(x, ((0, mp0 - n), (0, kp - in_dim)))
            out = pl.pallas_call(
                _linear_kernel_single,
                out_shape=jax.ShapeDtypeStruct((mp0, np_), dtype),
            )(xp, wp, bp)
            return out[:n, :out_dim]

        # ---------------- tiled (M, N, K) path ----------------
        tm = _pick_tile(mp0, 8, cap_m)
        mp = _round_up(mp0, tm)
        xp = jnp.pad(x, ((0, mp - n), (0, kp - in_dim)))
        grid = (mp // tm, np_ // tn, kp // tk)

        # Small-M weight-streaming regime: buffer W 3-deep to hide the DMA tail.
        w_spec = pl.BlockSpec((tk, tn), lambda i, j, k: (k, j))
        w_bufs = 2
        if mp <= 64 and grid[2] >= 3:
            try:
                w_spec = pl.BlockSpec((tk, tn), lambda i, j, k: (k, j),
                                      pipeline_mode=pl.Buffered(3))
                w_bufs = 3
            except TypeError:  # older jax without pipeline_mode: keep default
                pass

        use_f32_out = dtype == jnp.float32
        kernel = _linear_kernel_tiled_f32 if use_f32_out else _linear_kernel_tiled_acc
        scratch = [] if use_f32_out else [pltpu.VMEM((tm, tn), jnp.float32)]

        # VMEM budget from the actual buffered tile footprint (+2x headroom),
        # never the full physical VMEM (v7x only has 64 MiB per TensorCore).
        footprint = (2 * tm * tk + w_bufs * tk * tn + 2 * tn
                     + 2 * tm * tn) * itemsize
        if not use_f32_out:
            footprint += tm * tn * 4
        vmem_limit = int(min(max(2 * footprint, 16 << 20), 48 << 20))

        out = pl.pallas_call(
            kernel,
            out_shape=jax.ShapeDtypeStruct((mp, np_), dtype),
            grid_spec=pltpu.PrefetchScalarGridSpec(
                num_scalar_prefetch=0,
                grid=grid,
                in_specs=[
                    pl.BlockSpec((tm, tk), lambda i, j, k: (i, k)),   # x tile
                    w_spec,                                           # w tile
                    pl.BlockSpec((1, tn), lambda i, j, k: (0, j)),    # bias
                ],
                out_specs=pl.BlockSpec((tm, tn), lambda i, j, k: (i, j)),
                scratch_shapes=scratch,
            ),
            compiler_params=pltpu.CompilerParams(
                dimension_semantics=("parallel", "parallel", "arbitrary"),
                vmem_limit_bytes=vmem_limit,
            ),
        )(xp, wp, bp)
        return out[:n, :out_dim]

    return forward


if __name__ == "__main__":
    key = jax.random.PRNGKey(0)

    # --- Module-sized case: batch=8, input_dim=32, output_dim=16 (fast path) ---
    batch, input_dim, output_dim = 8, 32, 16
    kx, kw, kb, krest = jax.random.split(key, 4)
    bound = 1.0 / jnp.sqrt(jnp.float32(input_dim))
    w = jax.random.uniform(kw, (input_dim, output_dim), jnp.float32, -bound, bound)
    b = jax.random.uniform(kb, (output_dim,), jnp.float32, -bound, bound)
    x = jax.random.normal(kx, (batch, input_dim), jnp.float32)

    fc = make_fully_connected(w, b)
    out = fc(x)
    jax.block_until_ready(out)
    ref = jnp.dot(x, w, precision=jax.lax.Precision.HIGHEST) + b
    assert out.shape == (batch, output_dim)
    assert jnp.allclose(out, ref, atol=1e-5, rtol=1e-5)

    # --- Tiled path: multiple M/N/K tiles (K reduction + resident f32 output) ---
    n2, in2, out2 = 384, 1280, 768
    k1, k2, k3, k4 = jax.random.split(krest, 4)
    bound2 = 1.0 / jnp.sqrt(jnp.float32(in2))
    w2 = jax.random.uniform(k1, (in2, out2), jnp.float32, -bound2, bound2)
    b2 = jax.random.uniform(k2, (out2,), jnp.float32, -bound2, bound2)
    x2 = jax.random.normal(k3, (n2, in2), jnp.float32)
    fc2 = make_fully_connected(w2, b2)
    out_big = fc2(x2)
    jax.block_until_ready(out_big)
    ref_big = jnp.dot(x2, w2, precision=jax.lax.Precision.HIGHEST) + b2
    assert out_big.shape == (n2, out2)
    assert jnp.allclose(out_big, ref_big, atol=1e-3, rtol=1e-3)

    # --- Small-M weight-streaming regime (deep-buffered W, long K loop) ---
    n3, in3, out3 = 8, 4096, 1024
    k5, k6, k7 = jax.random.split(k4, 3)
    bound3 = 1.0 / jnp.sqrt(jnp.float32(in3))
    w3 = jax.random.uniform(k5, (in3, out3), jnp.float32, -bound3, bound3)
    b3 = jax.random.uniform(k6, (out3,), jnp.float32, -bound3, bound3)
    x3 = jax.random.normal(k7, (n3, in3), jnp.float32)
    fc3 = make_fully_connected(w3, b3)
    out_sm = fc3(x3)
    jax.block_until_ready(out_sm)
    ref_sm = jnp.dot(x3, w3, precision=jax.lax.Precision.HIGHEST) + b3
    assert out_sm.shape == (n3, out3)
    assert jnp.allclose(out_sm, ref_sm, atol=1e-3, rtol=1e-3)

    print("KERNEL_OK")
</pallas_src>

<mosaic_0001>
module attributes {stable_mosaic.version = 11 : i64} {
  func.func @_linear_kernel_single(%arg0: memref<8x128xf32, #tpu.memory_space<vmem>>, %arg1: memref<128x128xf32, #tpu.memory_space<vmem>>, %arg2: memref<1x128xf32, #tpu.memory_space<vmem>>, %arg3: memref<8x128xf32, #tpu.memory_space<vmem>>) attributes {dimension_semantics = [], scalar_prefetch = 0 : i64, scratch_operands = 0 : i64, tpu.core_type = #tpu.core_type<tc>} {
    %c0 = arith.constant 0 : index
    %c0_0 = arith.constant 0 : index
    %0 = vector.load %arg0[%c0, %c0_0] : memref<8x128xf32, #tpu.memory_space<vmem>>, vector<8x128xf32>
    %c0_1 = arith.constant 0 : index
    %c0_2 = arith.constant 0 : index
    %1 = vector.load %arg1[%c0_1, %c0_2] : memref<128x128xf32, #tpu.memory_space<vmem>>, vector<128x128xf32>
    %cst = arith.constant dense<0.000000e+00> : vector<8x128xf32>
    %2 = tpu.matmul %0, %1, %cst {dimension_numbers = #tpu.dot_dimension_numbers<[1], [0], [0], [1], [0, 0, 1, 1], [], []>} : vector<8x128xf32>, vector<128x128xf32>, vector<8x128xf32> -> vector<8x128xf32>
    %c0_3 = arith.constant 0 : index
    %c0_4 = arith.constant 0 : index
    %3 = vector.load %arg2[%c0_3, %c0_4] : memref<1x128xf32, #tpu.memory_space<vmem>>, vector<1x128xf32>
    %4 = vector.broadcast %3 : vector<1x128xf32> to vector<8x128xf32>
    %5 = arith.addf %2, %4 : vector<8x128xf32>
    %c0_5 = arith.constant 0 : index
    %c0_6 = arith.constant 0 : index
    %6 = vector.load %arg3[%c0_5, %c0_6] : memref<8x128xf32, #tpu.memory_space<vmem>>, vector<8x128xf32>
    tpu.vector_store %arg3[%c0_5, %c0_6], %5 {strides = array<i32>} : memref<8x128xf32, #tpu.memory_space<vmem>>, vector<8x128xf32>,
    return
  }
}

</mosaic_0001>

<llo_original>
// kernel: forward.1
$region0: #{forward.1}
  #allocation0 [shape = 'u32[]', space=smem, size = 0x4, offset = 0x4, fixed_abs, tag = 'smem constant byte address 0x4 - core index']
  #allocation1 [shape = 'u32[144,128]{1,0:T(1,128)}', space=vmem, size = 0x12000, scoped, tag = 'internal scratch']
  %s0 = inlined_call_operand.vmem [shape: f32[8,128], index: 0, kind: input, shape index: {}]
  %s1 = inlined_call_operand.hbm [shape: f32[128,128], index: 1, kind: input, shape index: {}]
  %s2 = inlined_call_operand.vmem [shape: f32[1,128], index: 2, kind: input, shape index: {}]
  %s3 = inlined_call_operand.hbm [shape: f32[8,128], index: 3, kind: output, shape index: {}]
  %s4 = sld [smem:[#allocation0]]
  $region26: #{forward.1} parent=0
    _
  %s6 = ssub.s32 1, %s4
  %s7 = scalar_select 0, %s6, %s4
  $region1: #{forward.1} parent=0
    #allocation2 [shape = 'u8[65536]{0}', space=vmem, size = 0x10000, scoped, tag = 'input window, operand 1, single buffered']
    #allocation3 [shape = 's32[1]{0}', space=sflag, size = 0x4, scoped, tag = 'scoped memory for forward.1']
    #allocation4 [shape = 's32[1]{0}', space=sflag, size = 0x4, scoped, tag = 'scoped memory for forward.1']
    #allocation5 [shape = 'u8[4096]{0}', space=vmem, size = 0x1000, scoped, tag = 'output window, operand 0, single buffered']
    %8 = vsyncpa [#allocation3], 0
    %9 = vsyncpa [#allocation4], 0
    // Predicated region
    $region2: #{forward.1} parent=1 // pred_check
      _
    $region3: #{forward.1} parent=1 // pred_check_branch
      %11 = sbr.rel (0) target = $region5
    $region4: #{forward.1} parent=1 // pred_region
      _
    $region5: #{forward.1} parent=1 // pred_fallthru
      _
    // Predicated region
    $region6: #{forward.1} parent=1 // pred_check
      _
    $region7: #{forward.1} parent=1 // pred_check_branch
      %13 = sbr.rel (0) target = $region9
    $region8: #{forward.1} parent=1 // pred_region
      %s15 = ssub.s32 2048, 2048
      %16 = vsyncadd [#allocation3], %s15
      %s17 = sshll.u32 [#allocation2], 4
      %s18 = int_to_ptr.vmem [resolvable:$true] %s17
      %23 = dma.hbm_to_vmem [thread:$0]  %s1, 2048, %s18, [#allocation3], 128, 128, 8
    $region9: #{forward.1} parent=1 // pred_fallthru
      _
    // Predicated region
    $region10: #{forward.1} parent=1 // pred_check
      _
    $region11: #{forward.1} parent=1 // pred_check_branch
      %25 = sbr.rel (0) target = $region13
    $region12: #{forward.1} parent=1 // pred_region
      _
    $region13: #{forward.1} parent=1 // pred_fallthru
      _
    // Predicated region
    $region14: #{forward.1} parent=1 // pred_check
      _
    $region15: #{forward.1} parent=1 // pred_check_branch
      %27 = sbr.rel (0) target = $region17
    $region16: #{forward.1} parent=1 // pred_region
      %28 = dma.done [#allocation3], 2048
    $region17: #{forward.1} parent=1 // pred_fallthru
      _
    %v29 = vld [vmem:[%s0] sm:$0xff]
    %v30 = vld [vmem:[#allocation2] sm:$0xff]
    %v31 = vld [vmem:[#allocation2 + $0x8] sm:$0xff]
    %v32 = vld [vmem:[#allocation2 + $0x10] sm:$0xff]
    %v33 = vld [vmem:[#allocation2 + $0x18] sm:$0xff]
    %v34 = vld [vmem:[#allocation2 + $0x20] sm:$0xff]
    %v35 = vld [vmem:[#allocation2 + $0x28] sm:$0xff]
    %v36 = vld [vmem:[#allocation2 + $0x30] sm:$0xff]
    %v37 = vld [vmem:[#allocation2 + $0x38] sm:$0xff]
    %v38 = vld [vmem:[#allocation2 + $0x40] sm:$0xff]
    %v39 = vld [vmem:[#allocation2 + $0x48] sm:$0xff]
    %v40 = vld [vmem:[#allocation2 + $0x50] sm:$0xff]
    %v41 = vld [vmem:[#allocation2 + $0x58] sm:$0xff]
    %v42 = vld [vmem:[#allocation2 + $0x60] sm:$0xff]
    %v43 = vld [vmem:[#allocation2 + $0x68] sm:$0xff]
    %v44 = vld [vmem:[#allocation2 + $0x70] sm:$0xff]
    %v45 = vld [vmem:[#allocation2 + $0x78] sm:$0xff]
    %v46 = vld [vmem:[%s2] sm:$0x1]
    %v48 = vlaneseq
    %v49 = vshrl.u32 %v48, 7
    %v50 = vsub.s32 0, %v49
    %v51 = vrot.slane %v46, %v50
    %53 = vmatprep.subr.mxu0 0.0
    %54 = vmatpush1.msra.mxu0 %v45
    %55 = vmatprep.subr.mxu0 0.0
    %56 = vmatpush1.msra.mxu0 %v44
    %57 = vmatprep.subr.mxu0 0.0
    %58 = vmatpush1.msra.mxu0 %v43
    %59 = vmatprep.subr.mxu0 0.0
    %60 = vmatpush1.msra.mxu0 %v42
    %61 = vmatprep.subr.mxu0 0.0
    %62 = vmatpush1.msra.mxu0 %v41
    %63 = vmatprep.subr.mxu0 0.0
    %64 = vmatpush1.msra.mxu0 %v40
    %65 = vmatprep.subr.mxu0 0.0
    %66 = vmatpush1.msra.mxu0 %v39
    %67 = vmatprep.subr.mxu0 0.0
    %68 = vmatpush1.msra.mxu0 %v38
    %69 = vmatprep.subr.mxu0 0.0
    %70 = vmatpush1.msra.mxu0 %v37
    %71 = vmatprep.subr.mxu0 0.0
    %72 = vmatpush1.msra.mxu0 %v36
    %73 = vmatprep.subr.mxu0 0.0
    %74 = vmatpush1.msra.mxu0 %v35
    %75 = vmatprep.subr.mxu0 0.0
    %76 = vmatpush1.msra.mxu0 %v34
    %77 = vmatprep.subr.mxu0 0.0
    %78 = vmatpush1.msra.mxu0 %v33
    %79 = vmatprep.subr.mxu0 0.0
    %80 = vmatpush1.msra.mxu0 %v32
    %81 = vmatprep.subr.mxu0 0.0
    %82 = vmatpush1.msra.mxu0 %v31
    %83 = vmatprep.subr.mxu0 0.0
    %84 = vmatpush1.msra.mxu0 %v30
    %85 = vmatprep.subr.mxu0 0.0
    %86 = vmatpush2.msra.mxu0 0.0
    %87 = vmatprep.subr.mxu0 0.0
    %88 = vmatpush2.msra.mxu0 0.0
    %89 = vmatprep.subr.mxu0 0.0
    %90 = vmatpush2.msra.mxu0 0.0
    %91 = vmatprep.subr.mxu0 0.0
    %92 = vmatpush2.msra.mxu0 0.0
    %93 = vmatprep.subr.mxu0 0.0
    %94 = vmatpush2.msra.mxu0 0.0
    %95 = vmatprep.subr.mxu0 0.0
    %96 = vmatpush2.msra.mxu0 0.0
    %97 = vmatprep.subr.mxu0 0.0
    %98 = vmatpush2.msra.mxu0 0.0
    %99 = vmatprep.subr.mxu0 0.0
    %100 = vmatpush2.msra.mxu0 0.0
    %101 = vmatprep.subr.mxu0 0.0
    %102 = vmatpush2.msra.mxu0 0.0
    %103 = vmatprep.subr.mxu0 0.0
    %104 = vmatpush2.msra.mxu0 0.0
    %105 = vmatprep.subr.mxu0 0.0
    %106 = vmatpush2.msra.mxu0 0.0
    %107 = vmatprep.subr.mxu0 0.0
    %108 = vmatpush2.msra.mxu0 0.0
    %109 = vmatprep.subr.mxu0 0.0
    %110 = vmatpush2.msra.mxu0 0.0
    %111 = vmatprep.subr.mxu0 0.0
    %112 = vmatpush2.msra.mxu0 0.0
    %113 = vmatprep.subr.mxu0 0.0
    %114 = vmatpush2.msra.mxu0 0.0
    %115 = vmatprep.subr.mxu0 0.0
    %116 = vmatpush2.msra.mxu0 0.0
    %117 = vmatprep.mubr.f32.mxu0 0.0
    %118 = vmatmul.mubr.f32.gmra.mxu0 %v29
    %v119 = vpop.f32.mrf.mxu0
    %v120 = vadd.f32 %v51, %v119
    %v121 = vpop.f32.mrf.mxu0
    %122 = vdwg.mxu0
    %123 = vst [vmem:[#allocation5] sm:$0xff] %v120
    // Predicated region
    $region18: #{forward.1} parent=1 // pred_check
      _
    $region19: #{forward.1} parent=1 // pred_check_branch
      %125 = sbr.rel (0) target = $region21
    $region20: #{forward.1} parent=1 // pred_region
      %s127 = ssub.s32 128, 128
      %128 = vsyncadd [#allocation4], %s127
      %s130 = sshll.u32 [#allocation5], 4
      %s131 = int_to_ptr.vmem [resolvable:$true] %s130
      %133 = dma.vmem_to_hbm [thread:$0]  %s131, 128, %s3, [#allocation4]
    $region21: #{forward.1} parent=1 // pred_fallthru
      _
    // Predicated region
    $region22: #{forward.1} parent=1 // pred_check
      _
    $region23: #{forward.1} parent=1 // pred_check_branch
      %135 = sbr.rel (0) target = $region25
    $region24: #{forward.1} parent=1 // pred_region
      %136 = dma.done [#allocation4], 128
    $region25: #{forward.1} parent=1 // pred_fallthru
      _
    %137 = vsyncpa [#allocation3], 1
    %138 = vsyncpa [#allocation4], 1

</llo_original>
